<compile_context>
chip_gen: v7x
topology: tpu7x:2x2x1
jax: 0.10.0
libtpu: 0.0.40
codegen_flags: <defaults>
</compile_context>

<pallas_src>
import jax
import jax.numpy as jnp
from jax.experimental import pallas as pl
from jax.experimental.pallas import tpu as pltpu


# ----------------------------------------------------------------------------
# Kernel: fused twin-Q forward, one batch tile per grid step.
# ----------------------------------------------------------------------------
def critic_fused_kernel(x_ref,                       # [TB, S+A]   f32
                        w1_ref, b1_ref,              # [S+A,512]bf16, [1,512]f32
                        wh1_ref, bh1_ref,            # [256,256]bf16, [1,256]f32
                        wh2_ref, bh2_ref,            # [256,256]bf16, [1,256]f32
                        wo1_ref, wo2_ref, bo_ref,    # [256,2]bf16 x2, [1,2]f32
                        out_ref):                    # [TB, 2]     f32
    f32 = jnp.float32
    relu = lambda v: jnp.maximum(v, 0.0)
    cdt = w1_ref.dtype  # compute dtype of the fused weights (bf16 by default)

    # Layer 1, both heads and both sources in ONE matmul:
    #   z = (q1_s | q1_a | q2_s | q2_a)   [TB, 512]
    x = x_ref[...].astype(cdt)
    z = relu(jnp.dot(x, w1_ref[...], preferred_element_type=f32) + b1_ref[...])

    # Hidden layer: two dense K=256 matmuls on 128-aligned lane slices of z
    # (no zero-padded blocks -> reference MAC count on all chip generations).
    kh = wh1_ref.shape[0]                      # = 256, derived (not hardcoded)
    z16 = z.astype(cdt)
    h1 = relu(jnp.dot(z16[:, :kh], wh1_ref[...],
                      preferred_element_type=f32) + bh1_ref[...])
    h2 = relu(jnp.dot(z16[:, kh:], wh2_ref[...],
                      preferred_element_type=f32) + bh2_ref[...])

    # Output layer: zero-padded [256, 2] weights so the two heads accumulate
    # into one lane-packed [TB, 2] tile (single store, single output DMA).
    out_ref[...] = (
        jnp.dot(h1.astype(cdt), wo1_ref[...], preferred_element_type=f32)
        + jnp.dot(h2.astype(cdt), wo2_ref[...], preferred_element_type=f32)
        + bo_ref[...])


# ----------------------------------------------------------------------------
# Parameter fusion — call ONCE per parameter update, outside the jitted path.
# ----------------------------------------------------------------------------
def fuse_critic_params(p, weight_dtype=jnp.bfloat16):
    S = p["s1_w"].shape[0]
    A = p["a1_w"].shape[0]
    H = p["s1_w"].shape[1]          # per-head / per-source width (128)
    Hc = 2 * H                      # hidden-layer input width (256)
    z = lambda shape: jnp.zeros(shape, jnp.float32)

    # Layer 1: x = [state || action] -> columns (q1_s | q1_a | q2_s | q2_a).
    w1 = jnp.zeros((S + A, 4 * H), jnp.float32)
    w1 = w1.at[:S, 0 * H:1 * H].set(p["s1_w"])
    w1 = w1.at[S:, 1 * H:2 * H].set(p["a1_w"])
    w1 = w1.at[:S, 2 * H:3 * H].set(p["s2_w"])
    w1 = w1.at[S:, 3 * H:4 * H].set(p["a2_w"])
    b1 = jnp.concatenate([p["s1_b"], p["a1_b"], p["s2_b"], p["a2_b"]], axis=1)

    # Hidden layer: dense per-head weights (q?_sa ordering already matches).
    wh1, bh1 = p["l1_w"], p["l1_b"]
    wh2, bh2 = p["l3_w"], p["l3_b"]

    # Output layer: pad each [256,1] head to 2 lanes -> accumulate into [B,2].
    wo1 = jnp.concatenate([p["l2_w"], z((Hc, 1))], axis=1)
    wo2 = jnp.concatenate([z((Hc, 1)), p["l4_w"]], axis=1)
    bo = jnp.concatenate([p["l2_b"], p["l4_b"]], axis=1)

    cast = lambda w: w.astype(weight_dtype)
    # Biases stay f32 (added after the f32-accumulated dot).
    return (cast(w1), b1, cast(wh1), bh1, cast(wh2), bh2,
            cast(wo1), cast(wo2), bo)


# ----------------------------------------------------------------------------
# Batch-tile selection
# ----------------------------------------------------------------------------
def _pick_batch_tile(B):
    if B < 512:
        return B                    # single step; block == full batch extent
    # >= 2 grid steps so both v7x TensorCores get work; cap the tile at 512
    # rows (activation working set ~4 MiB f32, well under scoped-VMEM limits).
    tb = pl.cdiv(B, 2)
    tb = ((tb + 7) // 8) * 8        # sublane multiple (required when TB < B)
    return min(tb, 512)


# ----------------------------------------------------------------------------
# Wrapper
# ----------------------------------------------------------------------------
@jax.jit
def critic_forward(state, action, fused):
    """state: [B, S], action: [B, A], fused: output of fuse_critic_params."""
    x = jnp.concatenate([state, action], axis=1)   # one input DMA stream
    B, K = x.shape
    TB = _pick_batch_tile(B)
    grid = (pl.cdiv(B, TB),)

    resident = lambda arr: pl.BlockSpec(arr.shape, lambda i: (0, 0))
    in_specs = ([pl.BlockSpec((TB, K), lambda i: (i, 0))]
                + [resident(a) for a in fused])
    out_spec = pl.BlockSpec((TB, 2), lambda i: (i, 0))

    out = pl.pallas_call(
        critic_fused_kernel,
        out_shape=jax.ShapeDtypeStruct((B, 2), jnp.float32),
        grid=grid,
        in_specs=in_specs,
        out_specs=out_spec,
        compiler_params=pltpu.CompilerParams(
            dimension_semantics=("parallel",)),
    )(x, *fused)

    return out[:, 0:1], out[:, 1:2]


# ----------------------------------------------------------------------------
# Deterministic parameter init (mimics torch.nn.Linear default init bounds)
# ----------------------------------------------------------------------------
def init_linear(key, in_dim, out_dim):
    kw, kb = jax.random.split(key)
    bound = 1.0 / jnp.sqrt(jnp.float32(in_dim))
    # PyTorch stores W as [out, in]; we keep the transposed [in, out] layout.
    w = jax.random.uniform(kw, (in_dim, out_dim), jnp.float32, -bound, bound)
    b = jax.random.uniform(kb, (1, out_dim), jnp.float32, -bound, bound)
    return w, b


def init_critic_params(key, state_dim, action_dim):
    keys = jax.random.split(key, 8)
    p = {}
    p["s1_w"], p["s1_b"] = init_linear(keys[0], state_dim, 128)
    p["a1_w"], p["a1_b"] = init_linear(keys[1], action_dim, 128)
    p["s2_w"], p["s2_b"] = init_linear(keys[2], state_dim, 128)
    p["a2_w"], p["a2_b"] = init_linear(keys[3], action_dim, 128)
    p["l1_w"], p["l1_b"] = init_linear(keys[4], 256, 256)
    p["l2_w"], p["l2_b"] = init_linear(keys[5], 256, 1)
    p["l3_w"], p["l3_b"] = init_linear(keys[6], 256, 256)
    p["l4_w"], p["l4_b"] = init_linear(keys[7], 256, 1)
    return p


# Pure-JAX f32 reference (un-fused, mirrors the PyTorch module exactly).
def critic_ref(state, action, p):
    relu = lambda x: jnp.maximum(x, 0.0)
    lin = lambda x, w, b: x @ w + b
    q1_sa = jnp.concatenate([relu(lin(state, p["s1_w"], p["s1_b"])),
                             relu(lin(action, p["a1_w"], p["a1_b"]))], axis=1)
    q1 = lin(relu(lin(q1_sa, p["l1_w"], p["l1_b"])), p["l2_w"], p["l2_b"])
    q2_sa = jnp.concatenate([relu(lin(state, p["s2_w"], p["s2_b"])),
                             relu(lin(action, p["a2_w"], p["a2_b"]))], axis=1)
    q2 = lin(relu(lin(q2_sa, p["l3_w"], p["l3_b"])), p["l4_w"], p["l4_b"])
    return q1, q2


if __name__ == "__main__":
    STATE_DIM, ACTION_DIM = 16, 4
    key = jax.random.PRNGKey(0)
    k_s, k_a, k_p = jax.random.split(key, 3)
    params = init_critic_params(k_p, STATE_DIM, ACTION_DIM)

    # Fuse/cast weights ONCE (per parameter update), outside the jitted call.
    fused = jax.block_until_ready(fuse_critic_params(params))

    # bf16 weights => compare against the f32 reference with loosened
    # tolerances (~1% relative), as anticipated by the perf review.
    TOL = dict(atol=3e-2, rtol=3e-2)

    # Small demo batch (single grid step, whole batch resident).
    B = 8
    state = jax.random.normal(k_s, (B, STATE_DIM), jnp.float32)
    action = jax.random.normal(k_a, (B, ACTION_DIM), jnp.float32)
    q1, q2 = critic_forward(state, action, fused)
    jax.block_until_ready((q1, q2))
    q1_ref, q2_ref = critic_ref(state, action, params)
    assert q1.shape == (B, 1) and q2.shape == (B, 1)
    assert jnp.allclose(q1, q1_ref, **TOL)
    assert jnp.allclose(q2, q2_ref, **TOL)

    # Larger batch exercises the multi-step "parallel" batch grid
    # (B=1024 -> TB=512, grid=(2,); weights stay VMEM-resident).
    B2 = 1024
    state2 = jax.random.normal(k_s, (B2, STATE_DIM), jnp.float32)
    action2 = jax.random.normal(k_a, (B2, ACTION_DIM), jnp.float32)
    q1b, q2b = critic_forward(state2, action2, fused)
    jax.block_until_ready((q1b, q2b))
    q1b_ref, q2b_ref = critic_ref(state2, action2, params)
    assert jnp.allclose(q1b, q1b_ref, **TOL)
    assert jnp.allclose(q2b, q2b_ref, **TOL)

    print("KERNEL_OK")
</pallas_src>

<mosaic_0001>
module attributes {stable_mosaic.version = 11 : i64} {
  func.func @critic_fused_kernel(%arg0: i32, %arg1: memref<8x20xf32, #tpu.memory_space<vmem>>, %arg2: memref<20x512xbf16, #tpu.memory_space<vmem>>, %arg3: memref<1x512xf32, #tpu.memory_space<vmem>>, %arg4: memref<256x256xbf16, #tpu.memory_space<vmem>>, %arg5: memref<1x256xf32, #tpu.memory_space<vmem>>, %arg6: memref<256x256xbf16, #tpu.memory_space<vmem>>, %arg7: memref<1x256xf32, #tpu.memory_space<vmem>>, %arg8: memref<256x2xbf16, #tpu.memory_space<vmem>>, %arg9: memref<256x2xbf16, #tpu.memory_space<vmem>>, %arg10: memref<1x2xf32, #tpu.memory_space<vmem>>, %arg11: memref<8x2xf32, #tpu.memory_space<vmem>>) attributes {dimension_semantics = [#tpu.dimension_semantics<parallel>], iteration_bounds = array<i64: 1>, scalar_prefetch = 0 : i64, scratch_operands = 0 : i64, tpu.core_type = #tpu.core_type<tc>, window_params = [{transform_indices = @transform_0, window_bounds = array<i64: 8, 20>}, {pipeline_mode = #tpu.pipeline_mode<synchronous>, transform_indices = @transform_1, window_bounds = array<i64: 20, 512>}, {pipeline_mode = #tpu.pipeline_mode<synchronous>, transform_indices = @transform_2, window_bounds = array<i64: 1, 512>}, {pipeline_mode = #tpu.pipeline_mode<synchronous>, transform_indices = @transform_3, window_bounds = array<i64: 256, 256>}, {pipeline_mode = #tpu.pipeline_mode<synchronous>, transform_indices = @transform_4, window_bounds = array<i64: 1, 256>}, {pipeline_mode = #tpu.pipeline_mode<synchronous>, transform_indices = @transform_5, window_bounds = array<i64: 256, 256>}, {pipeline_mode = #tpu.pipeline_mode<synchronous>, transform_indices = @transform_6, window_bounds = array<i64: 1, 256>}, {pipeline_mode = #tpu.pipeline_mode<synchronous>, transform_indices = @transform_7, window_bounds = array<i64: 256, 2>}, {pipeline_mode = #tpu.pipeline_mode<synchronous>, transform_indices = @transform_8, window_bounds = array<i64: 256, 2>}, {pipeline_mode = #tpu.pipeline_mode<synchronous>, transform_indices = @transform_9, window_bounds = array<i64: 1, 2>}, {transform_indices = @transform_10, window_bounds = array<i64: 8, 2>}]} {
    %c0 = arith.constant 0 : index
    %c0_0 = arith.constant 0 : index
    %0 = vector.load %arg1[%c0, %c0_0] : memref<8x20xf32, #tpu.memory_space<vmem>>, vector<8x20xf32>
    %1 = arith.truncf %0 : vector<8x20xf32> to vector<8x20xbf16>
    %c0_1 = arith.constant 0 : index
    %c0_2 = arith.constant 0 : index
    %2 = vector.load %arg2[%c0_1, %c0_2] : memref<20x512xbf16, #tpu.memory_space<vmem>>, vector<20x512xbf16>
    %cst = arith.constant dense<0.000000e+00> : vector<8x512xf32>
    %3 = tpu.matmul %1, %2, %cst {dimension_numbers = #tpu.dot_dimension_numbers<[1], [0], [0], [1], [0, 0, 1, 1], [], []>} : vector<8x20xbf16>, vector<20x512xbf16>, vector<8x512xf32> -> vector<8x512xf32>
    %c0_3 = arith.constant 0 : index
    %c0_4 = arith.constant 0 : index
    %4 = vector.load %arg3[%c0_3, %c0_4] : memref<1x512xf32, #tpu.memory_space<vmem>>, vector<1x512xf32>
    %5 = vector.broadcast %4 : vector<1x512xf32> to vector<8x512xf32>
    %6 = arith.addf %3, %5 : vector<8x512xf32>
    %cst_5 = arith.constant 0.000000e+00 : f32
    %7 = vector.broadcast %cst_5 : f32 to vector<8x512xf32>
    %8 = arith.maximumf %6, %7 : vector<8x512xf32>
    %9 = arith.truncf %8 : vector<8x512xf32> to vector<8x512xbf16>
    %10 = vector.extract_strided_slice %9 {offsets = [0, 0], sizes = [8, 256], strides = [1, 1]} : vector<8x512xbf16> to vector<8x256xbf16>
    %c0_6 = arith.constant 0 : index
    %c0_7 = arith.constant 0 : index
    %11 = vector.load %arg4[%c0_6, %c0_7] : memref<256x256xbf16, #tpu.memory_space<vmem>>, vector<256x256xbf16>
    %cst_8 = arith.constant dense<0.000000e+00> : vector<8x256xf32>
    %12 = tpu.matmul %10, %11, %cst_8 {dimension_numbers = #tpu.dot_dimension_numbers<[1], [0], [0], [1], [0, 0, 1, 1], [], []>} : vector<8x256xbf16>, vector<256x256xbf16>, vector<8x256xf32> -> vector<8x256xf32>
    %c0_9 = arith.constant 0 : index
    %c0_10 = arith.constant 0 : index
    %13 = vector.load %arg5[%c0_9, %c0_10] : memref<1x256xf32, #tpu.memory_space<vmem>>, vector<1x256xf32>
    %14 = vector.broadcast %13 : vector<1x256xf32> to vector<8x256xf32>
    %15 = arith.addf %12, %14 : vector<8x256xf32>
    %cst_11 = arith.constant 0.000000e+00 : f32
    %16 = vector.broadcast %cst_11 : f32 to vector<8x256xf32>
    %17 = arith.maximumf %15, %16 : vector<8x256xf32>
    %18 = vector.extract_strided_slice %9 {offsets = [0, 256], sizes = [8, 256], strides = [1, 1]} : vector<8x512xbf16> to vector<8x256xbf16>
    %c0_12 = arith.constant 0 : index
    %c0_13 = arith.constant 0 : index
    %19 = vector.load %arg6[%c0_12, %c0_13] : memref<256x256xbf16, #tpu.memory_space<vmem>>, vector<256x256xbf16>
    %cst_14 = arith.constant dense<0.000000e+00> : vector<8x256xf32>
    %20 = tpu.matmul %18, %19, %cst_14 {dimension_numbers = #tpu.dot_dimension_numbers<[1], [0], [0], [1], [0, 0, 1, 1], [], []>} : vector<8x256xbf16>, vector<256x256xbf16>, vector<8x256xf32> -> vector<8x256xf32>
    %c0_15 = arith.constant 0 : index
    %c0_16 = arith.constant 0 : index
    %21 = vector.load %arg7[%c0_15, %c0_16] : memref<1x256xf32, #tpu.memory_space<vmem>>, vector<1x256xf32>
    %22 = vector.broadcast %21 : vector<1x256xf32> to vector<8x256xf32>
    %23 = arith.addf %20, %22 : vector<8x256xf32>
    %cst_17 = arith.constant 0.000000e+00 : f32
    %24 = vector.broadcast %cst_17 : f32 to vector<8x256xf32>
    %25 = arith.maximumf %23, %24 : vector<8x256xf32>
    %26 = arith.truncf %17 : vector<8x256xf32> to vector<8x256xbf16>
    %c0_18 = arith.constant 0 : index
    %c0_19 = arith.constant 0 : index
    %27 = vector.load %arg8[%c0_18, %c0_19] : memref<256x2xbf16, #tpu.memory_space<vmem>>, vector<256x2xbf16>
    %cst_20 = arith.constant dense<0.000000e+00> : vector<8x2xf32>
    %28 = tpu.matmul %26, %27, %cst_20 {dimension_numbers = #tpu.dot_dimension_numbers<[1], [0], [0], [1], [0, 0, 1, 1], [], []>} : vector<8x256xbf16>, vector<256x2xbf16>, vector<8x2xf32> -> vector<8x2xf32>
    %29 = arith.truncf %25 : vector<8x256xf32> to vector<8x256xbf16>
    %c0_21 = arith.constant 0 : index
    %c0_22 = arith.constant 0 : index
    %30 = vector.load %arg9[%c0_21, %c0_22] : memref<256x2xbf16, #tpu.memory_space<vmem>>, vector<256x2xbf16>
    %cst_23 = arith.constant dense<0.000000e+00> : vector<8x2xf32>
    %31 = tpu.matmul %29, %30, %cst_23 {dimension_numbers = #tpu.dot_dimension_numbers<[1], [0], [0], [1], [0, 0, 1, 1], [], []>} : vector<8x256xbf16>, vector<256x2xbf16>, vector<8x2xf32> -> vector<8x2xf32>
    %32 = arith.addf %28, %31 : vector<8x2xf32>
    %c0_24 = arith.constant 0 : index
    %c0_25 = arith.constant 0 : index
    %33 = vector.load %arg10[%c0_24, %c0_25] : memref<1x2xf32, #tpu.memory_space<vmem>>, vector<1x2xf32>
    %34 = vector.broadcast %33 : vector<1x2xf32> to vector<8x2xf32>
    %35 = arith.addf %32, %34 : vector<8x2xf32>
    %c0_26 = arith.constant 0 : index
    %c0_27 = arith.constant 0 : index
    %36 = vector.load %arg11[%c0_26, %c0_27] : memref<8x2xf32, #tpu.memory_space<vmem>>, vector<8x2xf32>
    tpu.vector_store %arg11[%c0_26, %c0_27], %35 {strides = array<i32>} : memref<8x2xf32, #tpu.memory_space<vmem>>, vector<8x2xf32>,
    return
  }
  func.func @transform_0(%arg0: i32) -> (i32, i32) {
    %c0_i32 = arith.constant 0 : i32
    %c0_i32_0 = arith.constant 0 : i32
    return %arg0, %c0_i32 : i32, i32
  }
  func.func @transform_1(%arg0: i32) -> (i32, i32) {
    %c0_i32 = arith.constant 0 : i32
    %c0_i32_0 = arith.constant 0 : i32
    %c0_i32_1 = arith.constant 0 : i32
    return %c0_i32, %c0_i32_0 : i32, i32
  }
  func.func @transform_2(%arg0: i32) -> (i32, i32) {
    %c0_i32 = arith.constant 0 : i32
    %c0_i32_0 = arith.constant 0 : i32
    %c0_i32_1 = arith.constant 0 : i32
    return %c0_i32, %c0_i32_0 : i32, i32
  }
  func.func @transform_3(%arg0: i32) -> (i32, i32) {
    %c0_i32 = arith.constant 0 : i32
    %c0_i32_0 = arith.constant 0 : i32
    %c0_i32_1 = arith.constant 0 : i32
    return %c0_i32, %c0_i32_0 : i32, i32
  }
  func.func @transform_4(%arg0: i32) -> (i32, i32) {
    %c0_i32 = arith.constant 0 : i32
    %c0_i32_0 = arith.constant 0 : i32
    %c0_i32_1 = arith.constant 0 : i32
    return %c0_i32, %c0_i32_0 : i32, i32
  }
  func.func @transform_5(%arg0: i32) -> (i32, i32) {
    %c0_i32 = arith.constant 0 : i32
    %c0_i32_0 = arith.constant 0 : i32
    %c0_i32_1 = arith.constant 0 : i32
    return %c0_i32, %c0_i32_0 : i32, i32
  }
  func.func @transform_6(%arg0: i32) -> (i32, i32) {
    %c0_i32 = arith.constant 0 : i32
    %c0_i32_0 = arith.constant 0 : i32
    %c0_i32_1 = arith.constant 0 : i32
    return %c0_i32, %c0_i32_0 : i32, i32
  }
  func.func @transform_7(%arg0: i32) -> (i32, i32) {
    %c0_i32 = arith.constant 0 : i32
    %c0_i32_0 = arith.constant 0 : i32
    %c0_i32_1 = arith.constant 0 : i32
    return %c0_i32, %c0_i32_0 : i32, i32
  }
  func.func @transform_8(%arg0: i32) -> (i32, i32) {
    %c0_i32 = arith.constant 0 : i32
    %c0_i32_0 = arith.constant 0 : i32
    %c0_i32_1 = arith.constant 0 : i32
    return %c0_i32, %c0_i32_0 : i32, i32
  }
  func.func @transform_9(%arg0: i32) -> (i32, i32) {
    %c0_i32 = arith.constant 0 : i32
    %c0_i32_0 = arith.constant 0 : i32
    %c0_i32_1 = arith.constant 0 : i32
    return %c0_i32, %c0_i32_0 : i32, i32
  }
  func.func @transform_10(%arg0: i32) -> (i32, i32) {
    %c0_i32 = arith.constant 0 : i32
    %c0_i32_0 = arith.constant 0 : i32
    return %arg0, %c0_i32 : i32, i32
  }
}

</mosaic_0001>

<llo_original>
// kernel: critic_forward.1
$region0: #{critic_forward.1}
  #allocation0 [shape = 'u32[]', space=smem, size = 0x4, offset = 0x4, fixed_abs, tag = 'smem constant byte address 0x4 - core index']
  #allocation1 [shape = 'u32[144,128]{1,0:T(1,128)}', space=vmem, size = 0x12000, scoped, tag = 'internal scratch']
  %s0 = inlined_call_operand.vmem [shape: f32[8,20], index: 0, kind: input, shape index: {}]
  %s1 = inlined_call_operand.vmem [shape: bf16[20,512], index: 1, kind: input, shape index: {}]
  %s2 = inlined_call_operand.vmem [shape: f32[1,512], index: 2, kind: input, shape index: {}]
  %s3 = inlined_call_operand.vmem [shape: bf16[256,256], index: 3, kind: input, shape index: {}]
  %s4 = inlined_call_operand.vmem [shape: f32[1,256], index: 4, kind: input, shape index: {}]
  %s5 = inlined_call_operand.hbm [shape: bf16[256,256], index: 5, kind: input, shape index: {}]
  %s6 = inlined_call_operand.vmem [shape: f32[1,256], index: 6, kind: input, shape index: {}]
  %s7 = inlined_call_operand.vmem [shape: bf16[256,2], index: 7, kind: input, shape index: {}]
  %s8 = inlined_call_operand.vmem [shape: bf16[256,2], index: 8, kind: input, shape index: {}]
  %s9 = inlined_call_operand.vmem [shape: f32[1,2], index: 9, kind: input, shape index: {}]
  %s10 = inlined_call_operand.vmem [shape: f32[8,2], index: 10, kind: output, shape index: {}]
  %s11 = sld [smem:[#allocation0]]
  $region54: #{critic_forward.1} parent=0
    _
  %s13 = ssub.s32 1, %s11
  %s14 = scalar_select 0, %s13, %s11
  $region1: #{critic_forward.1} parent=0
    #allocation2 [shape = 'u8[131072]{0}', space=vmem, size = 0x20000, scoped, tag = 'input window, operand 5, single buffered']
    #allocation3 [shape = 's32[1]{0}', space=sflag, size = 0x4, scoped, tag = 'scoped memory for critic_forward.1']
    %15 = vsyncpa [#allocation3], 0
    // Predicated region
    $region2: #{critic_forward.1} parent=1 // pred_check
      _
    $region3: #{critic_forward.1} parent=1 // pred_check_branch
      %17 = sbr.rel (0) target = $region5
    $region4: #{critic_forward.1} parent=1 // pred_region
      _
    $region5: #{critic_forward.1} parent=1 // pred_fallthru
      _
    // Predicated region
    $region6: #{critic_forward.1} parent=1 // pred_check
      _
    $region7: #{critic_forward.1} parent=1 // pred_check_branch
      %19 = sbr.rel (0) target = $region9
    $region8: #{critic_forward.1} parent=1 // pred_region
      _
    $region9: #{critic_forward.1} parent=1 // pred_fallthru
      _
    // Predicated region
    $region10: #{critic_forward.1} parent=1 // pred_check
      _
    $region11: #{critic_forward.1} parent=1 // pred_check_branch
      %21 = sbr.rel (0) target = $region13
    $region12: #{critic_forward.1} parent=1 // pred_region
      _
    $region13: #{critic_forward.1} parent=1 // pred_fallthru
      _
    // Predicated region
    $region14: #{critic_forward.1} parent=1 // pred_check
      _
    $region15: #{critic_forward.1} parent=1 // pred_check_branch
      %23 = sbr.rel (0) target = $region17
    $region16: #{critic_forward.1} parent=1 // pred_region
      _
    $region17: #{critic_forward.1} parent=1 // pred_fallthru
      _
    // Predicated region
    $region18: #{critic_forward.1} parent=1 // pred_check
      _
    $region19: #{critic_forward.1} parent=1 // pred_check_branch
      %25 = sbr.rel (0) target = $region21
    $region20: #{critic_forward.1} parent=1 // pred_region
      _
    $region21: #{critic_forward.1} parent=1 // pred_fallthru
      _
    // Predicated region
    $region22: #{critic_forward.1} parent=1 // pred_check
      _
    $region23: #{critic_forward.1} parent=1 // pred_check_branch
      %27 = sbr.rel (0) target = $region25
    $region24: #{critic_forward.1} parent=1 // pred_region
      %s29 = ssub.s32 4096, 4096
      %30 = vsyncadd [#allocation3], %s29
      %s31 = sshll.u32 [#allocation2], 4
      %s32 = int_to_ptr.vmem [resolvable:$true] %s31
      %37 = dma.hbm_to_vmem [thread:$0]  %s5, 4096, %s32, [#allocation3], 128, 128, 8
    $region25: #{critic_forward.1} parent=1 // pred_fallthru
      _
    // Predicated region
    $region26: #{critic_forward.1} parent=1 // pred_check
      _
    $region27: #{critic_forward.1} parent=1 // pred_check_branch
      %39 = sbr.rel (0) target = $region29
    $region28: #{critic_forward.1} parent=1 // pred_region
      _
    $region29: #{critic_forward.1} parent=1 // pred_fallthru
      _
    // Predicated region
    $region30: #{critic_forward.1} parent=1 // pred_check
      _
    $region31: #{critic_forward.1} parent=1 // pred_check_branch
      %41 = sbr.rel (0) target = $region33
    $region32: #{critic_forward.1} parent=1 // pred_region
      _
    $region33: #{critic_forward.1} parent=1 // pred_fallthru
      _
    // Predicated region
    $region34: #{critic_forward.1} parent=1 // pred_check
      _
    $region35: #{critic_forward.1} parent=1 // pred_check_branch
      %43 = sbr.rel (0) target = $region37
    $region36: #{critic_forward.1} parent=1 // pred_region
      _
    $region37: #{critic_forward.1} parent=1 // pred_fallthru
      _
    // Predicated region
    $region38: #{critic_forward.1} parent=1 // pred_check
      _
    $region39: #{critic_forward.1} parent=1 // pred_check_branch
      %45 = sbr.rel (0) target = $region41
    $region40: #{critic_forward.1} parent=1 // pred_region
      _
    $region41: #{critic_forward.1} parent=1 // pred_fallthru
      _
    // Predicated region
    $region42: #{critic_forward.1} parent=1 // pred_check
      _
    $region43: #{critic_forward.1} parent=1 // pred_check_branch
      %47 = sbr.rel (0) target = $region45
    $region44: #{critic_forward.1} parent=1 // pred_region
      %48 = dma.done [#allocation3], 4096
    $region45: #{critic_forward.1} parent=1 // pred_fallthru
      _
    %v50 = vld [vmem:[%s0] sm:$0xff]
    %v51 = vpack.c.bf16 %v50, %v50
    %v52 = vld [vmem:[%s1] sm:$0xff]
    %v53 = vld [vmem:[%s1 + $0x8] sm:$0xff]
    %v54 = vld [vmem:[%s1 + $0x10] sm:$0xff]
    %v55 = vld [vmem:[%s1 + $0x18] sm:$0xff]
    %v56 = vld [vmem:[%s1 + $0x20] sm:$0x33]
    %v57 = vld [vmem:[%s1 + $0x28] sm:$0x33]
    %v58 = vld [vmem:[%s2] sm:$0xf]
    %v60 = vlaneseq
    %v61 = vshrl.u32 %v60, 7
    %v62 = vsub.s32 0, %v61
    %v63 = vrot.slane %v58, %v62
    %v64 = vlaneseq
    %v65 = vshrl.u32 %v64, 7
    %v66 = vsub.s32 1, %v65
    %v67 = vrot.slane %v58, %v66
    %v68 = vlaneseq
    %v69 = vshrl.u32 %v68, 7
    %v70 = vsub.s32 2, %v69
    %v71 = vrot.slane %v58, %v70
    %v72 = vlaneseq
    %v73 = vshrl.u32 %v72, 7
    %v74 = vsub.s32 3, %v73
    %v75 = vrot.slane %v58, %v74
    %v86 = vunpack.c.l.b16 %v52
    %v87 = vunpack.c.h.b16 %v52
    %v88 = vunpack.c.l.b16 %v53
    %v89 = vunpack.c.h.b16 %v53
    %v90 = vunpack.c.l.b16 %v54
    %v91 = vunpack.c.h.b16 %v54
    %v92 = vunpack.c.l.b16 %v55
    %v93 = vunpack.c.h.b16 %v55
    %v94 = vunpack.c.l.b16 %v56
    %v95 = vunpack.c.h.b16 %v56
    %v96 = vunpack.c.l.b16 %v57
    %v97 = vunpack.c.h.b16 %v57
    %v98 = vpack.c.b16 %v90, %v86
    %v99 = vpack.c.b16 %v91, %v87
    %v100 = vpack.c.b16 %v92, %v88
    %v101 = vpack.c.b16 %v93, %v89
    %v102 = vpack.c.b16 %v94, %v94
    %v103 = vpack.c.b16 %v95, %v95
    %v104 = vpack.c.b16 %v96, %v96
    %v105 = vpack.c.b16 %v97, %v97
    %vm110 = vcmask 162816
    %v112 = vsel %vm110, %v51, 0
    %vm114 = vcmask 1041408
    %v116 = vsel %vm114, %v102, 0
    %v119 = vsel %vm114, %v103, 0
    %v122 = vsel %vm114, %v104, 0
    %v125 = vsel %vm114, %v105, 0
    %127 = vmatprep.subr.bf16.mxu0 %v99
    %128 = vmatpush1.bf16.msra.mxu0 %v98
    %129 = vmatprep.subr.bf16.mxu0 %v119
    %130 = vmatpush1.bf16.msra.mxu0 %v116
    %131 = vmatprep.subr.bf16.mxu0 0
    %132 = vmatpush1.bf16.msra.mxu0 0
    %133 = vmatprep.subr.bf16.mxu0 0
    %134 = vmatpush1.bf16.msra.mxu0 0
    %135 = vmatprep.subr.bf16.mxu0 0
    %136 = vmatpush1.bf16.msra.mxu0 0
    %137 = vmatprep.subr.bf16.mxu0 0
    %138 = vmatpush1.bf16.msra.mxu0 0
    %139 = vmatprep.subr.bf16.mxu0 0
    %140 = vmatpush1.bf16.msra.mxu0 0
    %141 = vmatprep.subr.bf16.mxu0 0
    %142 = vmatpush1.bf16.msra.mxu0 0
    %143 = vmatprep.subr.bf16.mxu0 0
    %144 = vmatpush1.bf16.msra.mxu0 0
    %145 = vmatprep.subr.bf16.mxu0 0
    %146 = vmatpush1.bf16.msra.mxu0 0
    %147 = vmatprep.subr.bf16.mxu0 0
    %148 = vmatpush1.bf16.msra.mxu0 0
    %149 = vmatprep.subr.bf16.mxu0 0
    %150 = vmatpush1.bf16.msra.mxu0 0
    %151 = vmatprep.subr.bf16.mxu0 0
    %152 = vmatpush1.bf16.msra.mxu0 0
    %153 = vmatprep.subr.bf16.mxu0 0
    %154 = vmatpush1.bf16.msra.mxu0 0
    %155 = vmatprep.subr.bf16.mxu0 0
    %156 = vmatpush1.bf16.msra.mxu0 0
    %157 = vmatprep.subr.bf16.mxu0 0
    %158 = vmatpush1.bf16.msra.mxu0 0
    %159 = vmatprep.mubr.bf16.mxu0 0
    %160 = vmatmul.mubr.bf16.gmra.mrb[0].mxu0 %v112
    %v161 = vpop.f32.mrb[0].mxu0
    %v162 = vadd.f32 %v63, %v161
    %v163 = vpop.f32.mrb[0].mxu0
    %v164 = vadd.f32 %v67, %v163
    %v165 = vpop.f32.mrb[0].mxu0
    %v166 = vpop.f32.mrb[0].mxu0
    %167 = vdwg.mxu0
    %168 = vmatprep.subr.bf16.mxu0 %v101
    %169 = vmatpush1.bf16.msra.mxu0 %v100
    %170 = vmatprep.subr.bf16.mxu0 %v125
    %171 = vmatpush1.bf16.msra.mxu0 %v122
    %172 = vmatprep.subr.bf16.mxu0 0
    %173 = vmatpush1.bf16.msra.mxu0 0
    %174 = vmatprep.subr.bf16.mxu0 0
    %175 = vmatpush1.bf16.msra.mxu0 0
    %176 = vmatprep.subr.bf16.mxu0 0
    %177 = vmatpush1.bf16.msra.mxu0 0
    %178 = vmatprep.subr.bf16.mxu0 0
    %179 = vmatpush1.bf16.msra.mxu0 0
    %180 = vmatprep.subr.bf16.mxu0 0
    %181 = vmatpush1.bf16.msra.mxu0 0
    %182 = vmatprep.subr.bf16.mxu0 0
    %183 = vmatpush1.bf16.msra.mxu0 0
    %184 = vmatprep.subr.bf16.mxu0 0
    %185 = vmatpush1.bf16.msra.mxu0 0
    %186 = vmatprep.subr.bf16.mxu0 0
    %187 = vmatpush1.bf16.msra.mxu0 0
    %188 = vmatprep.subr.bf16.mxu0 0
    %189 = vmatpush1.bf16.msra.mxu0 0
    %190 = vmatprep.subr.bf16.mxu0 0
    %191 = vmatpush1.bf16.msra.mxu0 0
    %192 = vmatprep.subr.bf16.mxu0 0
    %193 = vmatpush1.bf16.msra.mxu0 0
    %194 = vmatprep.subr.bf16.mxu0 0
    %195 = vmatpush1.bf16.msra.mxu0 0
    %196 = vmatprep.subr.bf16.mxu0 0
    %197 = vmatpush1.bf16.msra.mxu0 0
    %198 = vmatprep.subr.bf16.mxu0 0
    %199 = vmatpush1.bf16.msra.mxu0 0
    %200 = vmatprep.mubr.bf16.mxu0 0
    %201 = vmatmul.mubr.bf16.gmra.mrb[0].mxu0 %v112
    %v202 = vpop.f32.mrb[0].mxu0
    %v203 = vadd.f32 %v71, %v202
    %v204 = vpop.f32.mrb[0].mxu0
    %v205 = vadd.f32 %v75, %v204
    %v206 = vpop.f32.mrb[0].mxu0
    %v207 = vpop.f32.mrb[0].mxu0
    %208 = vdwg.mxu0
    %v209 = vmax.f32 %v162, 0.0
    %v210 = vmax.f32 %v164, 0.0
    %v211 = vmax.f32 %v203, 0.0
    %v212 = vmax.f32 %v205, 0.0
    %v213 = vpack.c.bf16 %v209, %v209
    %v214 = vpack.c.bf16 %v210, %v210
    %v215 = vpack.c.bf16 %v211, %v211
    %v216 = vpack.c.bf16 %v212, %v212
    %v217 = vld [vmem:[%s3] sm:$0xff]
    %v218 = vld [vmem:[%s3 + $0x8] sm:$0xff]
    %v219 = vld [vmem:[%s3 + $0x10] sm:$0xff]
    %v220 = vld [vmem:[%s3 + $0x18] sm:$0xff]
    %v221 = vld [vmem:[%s3 + $0x20] sm:$0xff]
    %v222 = vld [vmem:[%s3 + $0x28] sm:$0xff]
    %v223 = vld [vmem:[%s3 + $0x30] sm:$0xff]
    %v224 = vld [vmem:[%s3 + $0x38] sm:$0xff]
    %v225 = vld [vmem:[%s3 + $0x40] sm:$0xff]
    %v226 = vld [vmem:[%s3 + $0x48] sm:$0xff]
    %v227 = vld [vmem:[%s3 + $0x50] sm:$0xff]
    %v228 = vld [vmem:[%s3 + $0x58] sm:$0xff]
    %v229 = vld [vmem:[%s3 + $0x60] sm:$0xff]
    %v230 = vld [vmem:[%s3 + $0x68] sm:$0xff]
    %v231 = vld [vmem:[%s3 + $0x70] sm:$0xff]
    %v232 = vld [vmem:[%s3 + $0x78] sm:$0xff]
    %v233 = vld [vmem:[%s3 + $0x80] sm:$0xff]
    %v234 = vld [vmem:[%s3 + $0x88] sm:$0xff]
    %v235 = vld [vmem:[%s3 + $0x90] sm:$0xff]
    %v236 = vld [vmem:[%s3 + $0x98] sm:$0xff]
    %v237 = vld [vmem:[%s3 + $0xa0] sm:$0xff]
    %v238 = vld [vmem:[%s3 + $0xa8] sm:$0xff]
    %v239 = vld [vmem:[%s3 + $0xb0] sm:$0xff]
    %v240 = vld [vmem:[%s3 + $0xb8] sm:$0xff]
    %v241 = vld [vmem:[%s3 + $0xc0] sm:$0xff]
    %v242 = vld [vmem:[%s3 + $0xc8] sm:$0xff]
    %v243 = vld [vmem:[%s3 + $0xd0] sm:$0xff]
    %v244 = vld [vmem:[%s3 + $0xd8] sm:$0xff]
    %v245 = vld [vmem:[%s3 + $0xe0] sm:$0xff]
    %v246 = vld [vmem:[%s3 + $0xe8] sm:$0xff]
    %v247 = vld [vmem:[%s3 + $0xf0] sm:$0xff]
    %v248 = vld [vmem:[%s3 + $0xf8] sm:$0xff]
    %v249 = vld [vmem:[%s4] sm:$0x3]
    %v251 = vlaneseq
    %v252 = vshrl.u32 %v251, 7
    %v253 = vsub.s32 0, %v252
    %v254 = vrot.slane %v249, %v253
    %v255 = vlaneseq
    %v256 = vshrl.u32 %v255, 7
    %v257 = vsub.s32 1, %v256
    %v258 = vrot.slane %v249, %v257
    %v293 = vunpack.c.l.b16 %v217
    %v294 = vunpack.c.h.b16 %v217
    %v295 = vunpack.c.l.b16 %v218
    %v296 = vunpack.c.h.b16 %v218
    %v297 = vunpack.c.l.b16 %v219
    %v298 = vunpack.c.h.b16 %v219
    %v299 = vunpack.c.l.b16 %v220
    %v300 = vunpack.c.h.b16 %v220
    %v301 = vunpack.c.l.b16 %v221
    %v302 = vunpack.c.h.b16 %v221
    %v303 = vunpack.c.l.b16 %v222
    %v304 = vunpack.c.h.b16 %v222
    %v305 = vunpack.c.l.b16 %v223
    %v306 = vunpack.c.h.b16 %v223
    %v307 = vunpack.c.l.b16 %v224
    %v308 = vunpack.c.h.b16 %v224
    %v309 = vunpack.c.l.b16 %v225
    %v310 = vunpack.c.h.b16 %v225
    %v311 = vunpack.c.l.b16 %v226
    %v312 = vunpack.c.h.b16 %v226
    %v313 = vunpack.c.l.b16 %v227
    %v314 = vunpack.c.h.b16 %v227
    %v315 = vunpack.c.l.b16 %v228
    %v316 = vunpack.c.h.b16 %v228
    %v317 = vunpack.c.l.b16 %v229
    %v318 = vunpack.c.h.b16 %v229
    %v319 = vunpack.c.l.b16 %v230
    %v320 = vunpack.c.h.b16 %v230
    %v321 = vunpack.c.l.b16 %v231
    %v322 = vunpack.c.h.b16 %v231
    %v323 = vunpack.c.l.b16 %v232
    %v324 = vunpack.c.h.b16 %v232
    %v325 = vunpack.c.l.b16 %v233
    %v326 = vunpack.c.h.b16 %v233
    %v327 = vunpack.c.l.b16 %v234
    %v328 = vunpack.c.h.b16 %v234
    %v329 = vunpack.c.l.b16 %v235
    %v330 = vunpack.c.h.b16 %v235
    %v331 = vunpack.c.l.b16 %v236
    %v332 = vunpack.c.h.b16 %v236
    %v333 = vunpack.c.l.b16 %v237
    %v334 = vunpack.c.h.b16 %v237
    %v335 = vunpack.c.l.b16 %v238
    %v336 = vunpack.c.h.b16 %v238
    %v337 = vunpack.c.l.b16 %v239
    %v338 = vunpack.c.h.b16 %v239
    %v339 = vunpack.c.l.b16 %v240
    %v340 = vunpack.c.h.b16 %v240
    %v341 = vunpack.c.l.b16 %v241
    %v342 = vunpack.c.h.b16 %v241
    %v343 = vunpack.c.l.b16 %v242
    %v344 = vunpack.c.h.b16 %v242
    %v345 = vunpack.c.l.b16 %v243
    %v346 = vunpack.c.h.b16 %v243
    %v347 = vunpack.c.l.b16 %v244
    %v348 = vunpack.c.h.b16 %v244
    %v349 = vunpack.c.l.b16 %v245
    %v350 = vunpack.c.h.b16 %v245
    %v351 = vunpack.c.l.b16 %v246
    %v352 = vunpack.c.h.b16 %v246
    %v353 = vunpack.c.l.b16 %v247
    %v354 = vunpack.c.h.b16 %v247
    %v355 = vunpack.c.l.b16 %v248
    %v356 = vunpack.c.h.b16 %v248
    %v357 = vpack.c.b16 %v295, %v293
    %v358 = vpack.c.b16 %v296, %v294
    %v359 = vpack.c.b16 %v299, %v297
    %v360 = vpack.c.b16 %v300, %v298
    %v361 = vpack.c.b16 %v303, %v301
    %v362 = vpack.c.b16 %v304, %v302
    %v363 = vpack.c.b16 %v307, %v305
    %v364 = vpack.c.b16 %v308, %v306
    %v365 = vpack.c.b16 %v311, %v309
    %v366 = vpack.c.b16 %v312, %v310
    %v367 = vpack.c.b16 %v315, %v313
    %v368 = vpack.c.b16 %v316, %v314
    %v369 = vpack.c.b16 %v319, %v317
    %v370 = vpack.c.b16 %v320, %v318
    %v371 = vpack.c.b16 %v323, %v321
    %v372 = vpack.c.b16 %v324, %v322
    %v373 = vpack.c.b16 %v327, %v325
    %v374 = vpack.c.b16 %v328, %v326
    %v375 = vpack.c.b16 %v331, %v329
    %v376 = vpack.c.b16 %v332, %v330
    %v377 = vpack.c.b16 %v335, %v333
    %v378 = vpack.c.b16 %v336, %v334
    %v379 = vpack.c.b16 %v339, %v337
    %v380 = vpack.c.b16 %v340, %v338
    %v381 = vpack.c.b16 %v343, %v341
    %v382 = vpack.c.b16 %v344, %v342
    %v383 = vpack.c.b16 %v347, %v345
    %v384 = vpack.c.b16 %v348, %v346
    %v385 = vpack.c.b16 %v351, %v349
    %v386 = vpack.c.b16 %v352, %v350
    %v387 = vpack.c.b16 %v355, %v353
    %v388 = vpack.c.b16 %v356, %v354
    %421 = vmatprep.subr.bf16.mxu0 %v358
    %422 = vmatpush1.bf16.msra.mxu0 %v357
    %423 = vmatprep.subr.bf16.mxu0 %v360
    %424 = vmatpush1.bf16.msra.mxu0 %v359
    %425 = vmatprep.subr.bf16.mxu0 %v362
    %426 = vmatpush1.bf16.msra.mxu0 %v361
    %427 = vmatprep.subr.bf16.mxu0 %v364
    %428 = vmatpush1.bf16.msra.mxu0 %v363
    %429 = vmatprep.subr.bf16.mxu0 %v366
    %430 = vmatpush1.bf16.msra.mxu0 %v365
    %431 = vmatprep.subr.bf16.mxu0 %v368
    %432 = vmatpush1.bf16.msra.mxu0 %v367
    %433 = vmatprep.subr.bf16.mxu0 %v370
    %434 = vmatpush1.bf16.msra.mxu0 %v369
    %435 = vmatprep.subr.bf16.mxu0 %v372
    %436 = vmatpush1.bf16.msra.mxu0 %v371
    %437 = vmatprep.subr.bf16.mxu0 %v374
    %438 = vmatpush1.bf16.msra.mxu0 %v373
    %439 = vmatprep.subr.bf16.mxu0 %v376
    %440 = vmatpush1.bf16.msra.mxu0 %v375
    %441 = vmatprep.subr.bf16.mxu0 %v378
    %442 = vmatpush1.bf16.msra.mxu0 %v377
    %443 = vmatprep.subr.bf16.mxu0 %v380
    %444 = vmatpush1.bf16.msra.mxu0 %v379
    %445 = vmatprep.subr.bf16.mxu0 %v382
    %446 = vmatpush1.bf16.msra.mxu0 %v381
    %447 = vmatprep.subr.bf16.mxu0 %v384
    %448 = vmatpush1.bf16.msra.mxu0 %v383
    %449 = vmatprep.subr.bf16.mxu0 %v386
    %450 = vmatpush1.bf16.msra.mxu0 %v385
    %451 = vmatprep.subr.bf16.mxu0 %v388
    %452 = vmatpush1.bf16.msra.mxu0 %v387
    %453 = vmatprep.mubr.bf16.mxu0 %v214
    %454 = vmatmul.mubr.bf16.gmra.mrb[0].mxu0 %v213
    %v455 = vpop.f32.mrb[0].mxu0
    %v456 = vadd.f32 %v254, %v455
    %v457 = vpop.f32.mrb[0].mxu0
    %v458 = vadd.f32 %v258, %v457
    %v459 = vpop.f32.mrb[0].mxu0
    %v460 = vpop.f32.mrb[0].mxu0
    %461 = vdwg.mxu0
    %v462 = vmax.f32 %v456, 0.0
    %v463 = vmax.f32 %v458, 0.0
    %v464 = vld [vmem:[#allocation2] sm:$0xff]
    %v465 = vld [vmem:[#allocation2 + $0x8] sm:$0xff]
    %v466 = vld [vmem:[#allocation2 + $0x10] sm:$0xff]
    %v467 = vld [vmem:[#allocation2 + $0x18] sm:$0xff]
    %v468 = vld [vmem:[#allocation2 + $0x20] sm:$0xff]
    %v469 = vld [vmem:[#allocation2 + $0x28] sm:$0xff]
    %v470 = vld [vmem:[#allocation2 + $0x30] sm:$0xff]
    %v471 = vld [vmem:[#allocation2 + $0x38] sm:$0xff]
    %v472 = vld [vmem:[#allocation2 + $0x40] sm:$0xff]
    %v473 = vld [vmem:[#allocation2 + $0x48] sm:$0xff]
    %v474 = vld [vmem:[#allocation2 + $0x50] sm:$0xff]
    %v475 = vld [vmem:[#allocation2 + $0x58] sm:$0xff]
    %v476 = vld [vmem:[#allocation2 + $0x60] sm:$0xff]
    %v477 = vld [vmem:[#allocation2 + $0x68] sm:$0xff]
    %v478 = vld [vmem:[#allocation2 + $0x70] sm:$0xff]
    %v479 = vld [vmem:[#allocation2 + $0x78] sm:$0xff]
    %v480 = vld [vmem:[#allocation2 + $0x80] sm:$0xff]
    %v481 = vld [vmem:[#allocation2 + $0x88] sm:$0xff]
    %v482 = vld [vmem:[#allocation2 + $0x90] sm:$0xff]
    %v483 = vld [vmem:[#allocation2 + $0x98] sm:$0xff]
    %v484 = vld [vmem:[#allocation2 + $0xa0] sm:$0xff]
    %v485 = vld [vmem:[#allocation2 + $0xa8] sm:$0xff]
    %v486 = vld [vmem:[#allocation2 + $0xb0] sm:$0xff]
    %v487 = vld [vmem:[#allocation2 + $0xb8] sm:$0xff]
    %v488 = vld [vmem:[#allocation2 + $0xc0] sm:$0xff]
    %v489 = vld [vmem:[#allocation2 + $0xc8] sm:$0xff]
    %v490 = vld [vmem:[#allocation2 + $0xd0] sm:$0xff]
    %v491 = vld [vmem:[#allocation2 + $0xd8] sm:$0xff]
    %v492 = vld [vmem:[#allocation2 + $0xe0] sm:$0xff]
    %v493 = vld [vmem:[#allocation2 + $0xe8] sm:$0xff]
    %v494 = vld [vmem:[#allocation2 + $0xf0] sm:$0xff]
    %v495 = vld [vmem:[#allocation2 + $0xf8] sm:$0xff]
    %v496 = vld [vmem:[%s6] sm:$0x3]
    %v498 = vlaneseq
    %v499 = vshrl.u32 %v498, 7
    %v500 = vsub.s32 0, %v499
    %v501 = vrot.slane %v496, %v500
    %v502 = vlaneseq
    %v503 = vshrl.u32 %v502, 7
    %v504 = vsub.s32 1, %v503
    %v505 = vrot.slane %v496, %v504
    %v540 = vunpack.c.l.b16 %v464
    %v541 = vunpack.c.h.b16 %v464
    %v542 = vunpack.c.l.b16 %v465
    %v543 = vunpack.c.h.b16 %v465
    %v544 = vunpack.c.l.b16 %v466
    %v545 = vunpack.c.h.b16 %v466
    %v546 = vunpack.c.l.b16 %v467
    %v547 = vunpack.c.h.b16 %v467
    %v548 = vunpack.c.l.b16 %v468
    %v549 = vunpack.c.h.b16 %v468
    %v550 = vunpack.c.l.b16 %v469
    %v551 = vunpack.c.h.b16 %v469
    %v552 = vunpack.c.l.b16 %v470
    %v553 = vunpack.c.h.b16 %v470
    %v554 = vunpack.c.l.b16 %v471
    %v555 = vunpack.c.h.b16 %v471
    %v556 = vunpack.c.l.b16 %v472
    %v557 = vunpack.c.h.b16 %v472
    %v558 = vunpack.c.l.b16 %v473
    %v559 = vunpack.c.h.b16 %v473
    %v560 = vunpack.c.l.b16 %v474
    %v561 = vunpack.c.h.b16 %v474
    %v562 = vunpack.c.l.b16 %v475
    %v563 = vunpack.c.h.b16 %v475
    %v564 = vunpack.c.l.b16 %v476
    %v565 = vunpack.c.h.b16 %v476
    %v566 = vunpack.c.l.b16 %v477
    %v567 = vunpack.c.h.b16 %v477
    %v568 = vunpack.c.l.b16 %v478
    %v569 = vunpack.c.h.b16 %v478
    %v570 = vunpack.c.l.b16 %v479
    %v571 = vunpack.c.h.b16 %v479
    %v572 = vunpack.c.l.b16 %v480
    %v573 = vunpack.c.h.b16 %v480
    %v574 = vunpack.c.l.b16 %v481
    %v575 = vunpack.c.h.b16 %v481
    %v576 = vunpack.c.l.b16 %v482
    %v577 = vunpack.c.h.b16 %v482
    %v578 = vunpack.c.l.b16 %v483
    %v579 = vunpack.c.h.b16 %v483
    %v580 = vunpack.c.l.b16 %v484
    %v581 = vunpack.c.h.b16 %v484
    %v582 = vunpack.c.l.b16 %v485
    %v583 = vunpack.c.h.b16 %v485
    %v584 = vunpack.c.l.b16 %v486
    %v585 = vunpack.c.h.b16 %v486
    %v586 = vunpack.c.l.b16 %v487
    %v587 = vunpack.c.h.b16 %v487
    %v588 = vunpack.c.l.b16 %v488
    %v589 = vunpack.c.h.b16 %v488
    %v590 = vunpack.c.l.b16 %v489
    %v591 = vunpack.c.h.b16 %v489
    %v592 = vunpack.c.l.b16 %v490
    %v593 = vunpack.c.h.b16 %v490
    %v594 = vunpack.c.l.b16 %v491
    %v595 = vunpack.c.h.b16 %v491
    %v596 = vunpack.c.l.b16 %v492
    %v597 = vunpack.c.h.b16 %v492
    %v598 = vunpack.c.l.b16 %v493
    %v599 = vunpack.c.h.b16 %v493
    %v600 = vunpack.c.l.b16 %v494
    %v601 = vunpack.c.h.b16 %v494
    %v602 = vunpack.c.l.b16 %v495
    %v603 = vunpack.c.h.b16 %v495
    %v604 = vpack.c.b16 %v542, %v540
    %v605 = vpack.c.b16 %v543, %v541
    %v606 = vpack.c.b16 %v546, %v544
    %v607 = vpack.c.b16 %v547, %v545
    %v608 = vpack.c.b16 %v550, %v548
    %v609 = vpack.c.b16 %v551, %v549
    %v610 = vpack.c.b16 %v554, %v552
    %v611 = vpack.c.b16 %v555, %v553
    %v612 = vpack.c.b16 %v558, %v556
    %v613 = vpack.c.b16 %v559, %v557
    %v614 = vpack.c.b16 %v562, %v560
    %v615 = vpack.c.b16 %v563, %v561
    %v616 = vpack.c.b16 %v566, %v564
    %v617 = vpack.c.b16 %v567, %v565
    %v618 = vpack.c.b16 %v570, %v568
    %v619 = vpack.c.b16 %v571, %v569
    %v620 = vpack.c.b16 %v574, %v572
    %v621 = vpack.c.b16 %v575, %v573
    %v622 = vpack.c.b16 %v578, %v576
    %v623 = vpack.c.b16 %v579, %v577
    %v624 = vpack.c.b16 %v582, %v580
    %v625 = vpack.c.b16 %v583, %v581
    %v626 = vpack.c.b16 %v586, %v584
    %v627 = vpack.c.b16 %v587, %v585
    %v628 = vpack.c.b16 %v590, %v588
    %v629 = vpack.c.b16 %v591, %v589
    %v630 = vpack.c.b16 %v594, %v592
    %v631 = vpack.c.b16 %v595, %v593
    %v632 = vpack.c.b16 %v598, %v596
    %v633 = vpack.c.b16 %v599, %v597
    %v634 = vpack.c.b16 %v602, %v600
    %v635 = vpack.c.b16 %v603, %v601
    %668 = vmatprep.subr.bf16.mxu0 %v605
    %669 = vmatpush1.bf16.msra.mxu0 %v604
    %670 = vmatprep.subr.bf16.mxu0 %v607
    %671 = vmatpush1.bf16.msra.mxu0 %v606
    %672 = vmatprep.subr.bf16.mxu0 %v609
    %673 = vmatpush1.bf16.msra.mxu0 %v608
    %674 = vmatprep.subr.bf16.mxu0 %v611
    %675 = vmatpush1.bf16.msra.mxu0 %v610
    %676 = vmatprep.subr.bf16.mxu0 %v613
    %677 = vmatpush1.bf16.msra.mxu0 %v612
    %678 = vmatprep.subr.bf16.mxu0 %v615
    %679 = vmatpush1.bf16.msra.mxu0 %v614
    %680 = vmatprep.subr.bf16.mxu0 %v617
    %681 = vmatpush1.bf16.msra.mxu0 %v616
    %682 = vmatprep.subr.bf16.mxu0 %v619
    %683 = vmatpush1.bf16.msra.mxu0 %v618
    %684 = vmatprep.subr.bf16.mxu0 %v621
    %685 = vmatpush1.bf16.msra.mxu0 %v620
    %686 = vmatprep.subr.bf16.mxu0 %v623
    %687 = vmatpush1.bf16.msra.mxu0 %v622
    %688 = vmatprep.subr.bf16.mxu0 %v625
    %689 = vmatpush1.bf16.msra.mxu0 %v624
    %690 = vmatprep.subr.bf16.mxu0 %v627
    %691 = vmatpush1.bf16.msra.mxu0 %v626
    %692 = vmatprep.subr.bf16.mxu0 %v629
    %693 = vmatpush1.bf16.msra.mxu0 %v628
    %694 = vmatprep.subr.bf16.mxu0 %v631
    %695 = vmatpush1.bf16.msra.mxu0 %v630
    %696 = vmatprep.subr.bf16.mxu0 %v633
    %697 = vmatpush1.bf16.msra.mxu0 %v632
    %698 = vmatprep.subr.bf16.mxu0 %v635
    %699 = vmatpush1.bf16.msra.mxu0 %v634
    %700 = vmatprep.mubr.bf16.mxu0 %v216
    %701 = vmatmul.mubr.bf16.gmra.mrb[0].mxu0 %v215
    %v702 = vpop.f32.mrb[0].mxu0
    %v703 = vadd.f32 %v501, %v702
    %v704 = vpop.f32.mrb[0].mxu0
    %v705 = vadd.f32 %v505, %v704
    %v706 = vpop.f32.mrb[0].mxu0
    %v707 = vpop.f32.mrb[0].mxu0
    %708 = vdwg.mxu0
    %v709 = vmax.f32 %v703, 0.0
    %v710 = vmax.f32 %v705, 0.0
    %v711 = vpack.c.bf16 %v462, %v462
    %v712 = vpack.c.bf16 %v463, %v463
    %v713 = vld [vmem:[%s7] sm:$0xf]
    %v714 = vld [vmem:[%s7 + $0x4] sm:$0xf]
    %v715 = vld [vmem:[%s7 + $0x8] sm:$0xf]
    %v716 = vld [vmem:[%s7 + $0xc] sm:$0xf]
    %v717 = vld [vmem:[%s7 + $0x10] sm:$0xf]
    %v718 = vld [vmem:[%s7 + $0x14] sm:$0xf]
    %v719 = vld [vmem:[%s7 + $0x18] sm:$0xf]
    %v720 = vld [vmem:[%s7 + $0x1c] sm:$0xf]
    %v721 = vld [vmem:[%s7 + $0x20] sm:$0xf]
    %v722 = vld [vmem:[%s7 + $0x24] sm:$0xf]
    %v723 = vld [vmem:[%s7 + $0x28] sm:$0xf]
    %v724 = vld [vmem:[%s7 + $0x2c] sm:$0xf]
    %v725 = vld [vmem:[%s7 + $0x30] sm:$0xf]
    %v726 = vld [vmem:[%s7 + $0x34] sm:$0xf]
    %v727 = vld [vmem:[%s7 + $0x38] sm:$0xf]
    %v728 = vld [vmem:[%s7 + $0x3c] sm:$0xf]
    %v729 = vld [vmem:[%s7 + $0x40] sm:$0xf]
    %v730 = vld [vmem:[%s7 + $0x44] sm:$0xf]
    %v731 = vld [vmem:[%s7 + $0x48] sm:$0xf]
    %v732 = vld [vmem:[%s7 + $0x4c] sm:$0xf]
    %v733 = vld [vmem:[%s7 + $0x50] sm:$0xf]
    %v734 = vld [vmem:[%s7 + $0x54] sm:$0xf]
    %v735 = vld [vmem:[%s7 + $0x58] sm:$0xf]
    %v736 = vld [vmem:[%s7 + $0x5c] sm:$0xf]
    %v737 = vld [vmem:[%s7 + $0x60] sm:$0xf]
    %v738 = vld [vmem:[%s7 + $0x64] sm:$0xf]
    %v739 = vld [vmem:[%s7 + $0x68] sm:$0xf]
    %v740 = vld [vmem:[%s7 + $0x6c] sm:$0xf]
    %v741 = vld [vmem:[%s7 + $0x70] sm:$0xf]
    %v742 = vld [vmem:[%s7 + $0x74] sm:$0xf]
    %v743 = vld [vmem:[%s7 + $0x78] sm:$0xf]
    %v744 = vld [vmem:[%s7 + $0x7c] sm:$0xf]
    %v745 = vpack.c.bf16 %v709, %v709
    %v746 = vpack.c.bf16 %v710, %v710
    %v747 = vld [vmem:[%s8] sm:$0xf]
    %v748 = vld [vmem:[%s8 + $0x4] sm:$0xf]
    %v749 = vld [vmem:[%s8 + $0x8] sm:$0xf]
    %v750 = vld [vmem:[%s8 + $0xc] sm:$0xf]
    %v751 = vld [vmem:[%s8 + $0x10] sm:$0xf]
    %v752 = vld [vmem:[%s8 + $0x14] sm:$0xf]
    %v753 = vld [vmem:[%s8 + $0x18] sm:$0xf]
    %v754 = vld [vmem:[%s8 + $0x1c] sm:$0xf]
    %v755 = vld [vmem:[%s8 + $0x20] sm:$0xf]
    %v756 = vld [vmem:[%s8 + $0x24] sm:$0xf]
    %v757 = vld [vmem:[%s8 + $0x28] sm:$0xf]
    %v758 = vld [vmem:[%s8 + $0x2c] sm:$0xf]
    %v759 = vld [vmem:[%s8 + $0x30] sm:$0xf]
    %v760 = vld [vmem:[%s8 + $0x34] sm:$0xf]
    %v761 = vld [vmem:[%s8 + $0x38] sm:$0xf]
    %v762 = vld [vmem:[%s8 + $0x3c] sm:$0xf]
    %v763 = vld [vmem:[%s8 + $0x40] sm:$0xf]
    %v764 = vld [vmem:[%s8 + $0x44] sm:$0xf]
    %v765 = vld [vmem:[%s8 + $0x48] sm:$0xf]
    %v766 = vld [vmem:[%s8 + $0x4c] sm:$0xf]
    %v767 = vld [vmem:[%s8 + $0x50] sm:$0xf]
    %v768 = vld [vmem:[%s8 + $0x54] sm:$0xf]
    %v769 = vld [vmem:[%s8 + $0x58] sm:$0xf]
    %v770 = vld [vmem:[%s8 + $0x5c] sm:$0xf]
    %v771 = vld [vmem:[%s8 + $0x60] sm:$0xf]
    %v772 = vld [vmem:[%s8 + $0x64] sm:$0xf]
    %v773 = vld [vmem:[%s8 + $0x68] sm:$0xf]
    %v774 = vld [vmem:[%s8 + $0x6c] sm:$0xf]
    %v775 = vld [vmem:[%s8 + $0x70] sm:$0xf]
    %v776 = vld [vmem:[%s8 + $0x74] sm:$0xf]
    %v777 = vld [vmem:[%s8 + $0x78] sm:$0xf]
    %v778 = vld [vmem:[%s8 + $0x7c] sm:$0xf]
    %v811 = vunpack.c.l.b16 %v747
    %v812 = vunpack.c.l.b16 %v748
    %v813 = vunpack.c.l.b16 %v749
    %v814 = vunpack.c.l.b16 %v750
    %v815 = vunpack.c.l.b16 %v751
    %v816 = vunpack.c.l.b16 %v752
    %v817 = vunpack.c.l.b16 %v753
    %v818 = vunpack.c.l.b16 %v754
    %v819 = vunpack.c.l.b16 %v755
    %v820 = vunpack.c.l.b16 %v756
    %v821 = vunpack.c.l.b16 %v757
    %v822 = vunpack.c.l.b16 %v758
    %v823 = vunpack.c.l.b16 %v759
    %v824 = vunpack.c.l.b16 %v760
    %v825 = vunpack.c.l.b16 %v761
    %v826 = vunpack.c.l.b16 %v762
    %v827 = vunpack.c.l.b16 %v763
    %v828 = vunpack.c.l.b16 %v764
    %v829 = vunpack.c.l.b16 %v765
    %v830 = vunpack.c.l.b16 %v766
    %v831 = vunpack.c.l.b16 %v767
    %v832 = vunpack.c.l.b16 %v768
    %v833 = vunpack.c.l.b16 %v769
    %v834 = vunpack.c.l.b16 %v770
    %v835 = vunpack.c.l.b16 %v771
    %v836 = vunpack.c.l.b16 %v772
    %v837 = vunpack.c.l.b16 %v773
    %v838 = vunpack.c.l.b16 %v774
    %v839 = vunpack.c.l.b16 %v775
    %v840 = vunpack.c.l.b16 %v776
    %v841 = vunpack.c.l.b16 %v777
    %v842 = vunpack.c.l.b16 %v778
    %v843 = vpack.c.b16 %v812, %v811
    %v844 = vpack.c.b16 %v814, %v813
    %v845 = vpack.c.b16 %v816, %v815
    %v846 = vpack.c.b16 %v818, %v817
    %v847 = vpack.c.b16 %v820, %v819
    %v848 = vpack.c.b16 %v822, %v821
    %v849 = vpack.c.b16 %v824, %v823
    %v850 = vpack.c.b16 %v826, %v825
    %v851 = vpack.c.b16 %v828, %v827
    %v852 = vpack.c.b16 %v830, %v829
    %v853 = vpack.c.b16 %v832, %v831
    %v854 = vpack.c.b16 %v834, %v833
    %v855 = vpack.c.b16 %v836, %v835
    %v856 = vpack.c.b16 %v838, %v837
    %v857 = vpack.c.b16 %v840, %v839
    %v858 = vpack.c.b16 %v842, %v841
    %875 = vmatprep.subr.bf16.mxu0 0
    %876 = vmatpush1.bf16.msra.mxu0 %v843
    %877 = vmatprep.subr.bf16.mxu0 0
    %878 = vmatpush1.bf16.msra.mxu0 %v844
    %879 = vmatprep.subr.bf16.mxu0 0
    %880 = vmatpush1.bf16.msra.mxu0 %v845
    %881 = vmatprep.subr.bf16.mxu0 0
    %882 = vmatpush1.bf16.msra.mxu0 %v846
    %883 = vmatprep.subr.bf16.mxu0 0
    %884 = vmatpush1.bf16.msra.mxu0 %v847
    %885 = vmatprep.subr.bf16.mxu0 0
    %886 = vmatpush1.bf16.msra.mxu0 %v848
    %887 = vmatprep.subr.bf16.mxu0 0
    %888 = vmatpush1.bf16.msra.mxu0 %v849
    %889 = vmatprep.subr.bf16.mxu0 0
    %890 = vmatpush1.bf16.msra.mxu0 %v850
    %891 = vmatprep.subr.bf16.mxu0 0
    %892 = vmatpush1.bf16.msra.mxu0 %v851
    %893 = vmatprep.subr.bf16.mxu0 0
    %894 = vmatpush1.bf16.msra.mxu0 %v852
    %895 = vmatprep.subr.bf16.mxu0 0
    %896 = vmatpush1.bf16.msra.mxu0 %v853
    %897 = vmatprep.subr.bf16.mxu0 0
    %898 = vmatpush1.bf16.msra.mxu0 %v854
    %899 = vmatprep.subr.bf16.mxu0 0
    %900 = vmatpush1.bf16.msra.mxu0 %v855
    %901 = vmatprep.subr.bf16.mxu0 0
    %902 = vmatpush1.bf16.msra.mxu0 %v856
    %903 = vmatprep.subr.bf16.mxu0 0
    %904 = vmatpush1.bf16.msra.mxu0 %v857
    %905 = vmatprep.subr.bf16.mxu0 0
    %906 = vmatpush1.bf16.msra.mxu0 %v858
    %907 = vmatprep.mubr.bf16.mxu0 %v746
    %908 = vmatmul.mubr.bf16.gmra.mrb[0].mxu0 %v745
    %v909 = vpop.f32.mrb[0].mxu0
    %v910 = vadd.f32 0.0, %v909
    %v911 = vpop.f32.mrb[0].mxu0
    %v912 = vpop.f32.mrb[0].mxu0
    %v913 = vpop.f32.mrb[0].mxu0
    %914 = vdwg.mxu0
    %v947 = vunpack.c.l.b16 %v713
    %v948 = vunpack.c.l.b16 %v714
    %v949 = vunpack.c.l.b16 %v715
    %v950 = vunpack.c.l.b16 %v716
    %v951 = vunpack.c.l.b16 %v717
    %v952 = vunpack.c.l.b16 %v718
    %v953 = vunpack.c.l.b16 %v719
    %v954 = vunpack.c.l.b16 %v720
    %v955 = vunpack.c.l.b16 %v721
    %v956 = vunpack.c.l.b16 %v722
    %v957 = vunpack.c.l.b16 %v723
    %v958 = vunpack.c.l.b16 %v724
    %v959 = vunpack.c.l.b16 %v725
    %v960 = vunpack.c.l.b16 %v726
    %v961 = vunpack.c.l.b16 %v727
    %v962 = vunpack.c.l.b16 %v728
    %v963 = vunpack.c.l.b16 %v729
    %v964 = vunpack.c.l.b16 %v730
    %v965 = vunpack.c.l.b16 %v731
    %v966 = vunpack.c.l.b16 %v732
    %v967 = vunpack.c.l.b16 %v733
    %v968 = vunpack.c.l.b16 %v734
    %v969 = vunpack.c.l.b16 %v735
    %v970 = vunpack.c.l.b16 %v736
    %v971 = vunpack.c.l.b16 %v737
    %v972 = vunpack.c.l.b16 %v738
    %v973 = vunpack.c.l.b16 %v739
    %v974 = vunpack.c.l.b16 %v740
    %v975 = vunpack.c.l.b16 %v741
    %v976 = vunpack.c.l.b16 %v742
    %v977 = vunpack.c.l.b16 %v743
    %v978 = vunpack.c.l.b16 %v744
    %v979 = vpack.c.b16 %v948, %v947
    %v980 = vpack.c.b16 %v950, %v949
    %v981 = vpack.c.b16 %v952, %v951
    %v982 = vpack.c.b16 %v954, %v953
    %v983 = vpack.c.b16 %v956, %v955
    %v984 = vpack.c.b16 %v958, %v957
    %v985 = vpack.c.b16 %v960, %v959
    %v986 = vpack.c.b16 %v962, %v961
    %v987 = vpack.c.b16 %v964, %v963
    %v988 = vpack.c.b16 %v966, %v965
    %v989 = vpack.c.b16 %v968, %v967
    %v990 = vpack.c.b16 %v970, %v969
    %v991 = vpack.c.b16 %v972, %v971
    %v992 = vpack.c.b16 %v974, %v973
    %v993 = vpack.c.b16 %v976, %v975
    %v994 = vpack.c.b16 %v978, %v977
    %1011 = vmatprep.subr.bf16.mxu0 0
    %1012 = vmatpush1.bf16.msra.mxu0 %v979
    %1013 = vmatprep.subr.bf16.mxu0 0
    %1014 = vmatpush1.bf16.msra.mxu0 %v980
    %1015 = vmatprep.subr.bf16.mxu0 0
    %1016 = vmatpush1.bf16.msra.mxu0 %v981
    %1017 = vmatprep.subr.bf16.mxu0 0
    %1018 = vmatpush1.bf16.msra.mxu0 %v982
    %1019 = vmatprep.subr.bf16.mxu0 0
    %1020 = vmatpush1.bf16.msra.mxu0 %v983
    %1021 = vmatprep.subr.bf16.mxu0 0
    %1022 = vmatpush1.bf16.msra.mxu0 %v984
    %1023 = vmatprep.subr.bf16.mxu0 0
    %1024 = vmatpush1.bf16.msra.mxu0 %v985
    %1025 = vmatprep.subr.bf16.mxu0 0
    %1026 = vmatpush1.bf16.msra.mxu0 %v986
    %1027 = vmatprep.subr.bf16.mxu0 0
    %1028 = vmatpush1.bf16.msra.mxu0 %v987
    %1029 = vmatprep.subr.bf16.mxu0 0
    %1030 = vmatpush1.bf16.msra.mxu0 %v988
    %1031 = vmatprep.subr.bf16.mxu0 0
    %1032 = vmatpush1.bf16.msra.mxu0 %v989
    %1033 = vmatprep.subr.bf16.mxu0 0
    %1034 = vmatpush1.bf16.msra.mxu0 %v990
    %1035 = vmatprep.subr.bf16.mxu0 0
    %1036 = vmatpush1.bf16.msra.mxu0 %v991
    %1037 = vmatprep.subr.bf16.mxu0 0
    %1038 = vmatpush1.bf16.msra.mxu0 %v992
    %1039 = vmatprep.subr.bf16.mxu0 0
    %1040 = vmatpush1.bf16.msra.mxu0 %v993
    %1041 = vmatprep.subr.bf16.mxu0 0
    %1042 = vmatpush1.bf16.msra.mxu0 %v994
    %1043 = vmatprep.mubr.bf16.mxu0 %v712
    %1044 = vmatmul.mubr.bf16.gmra.mrb[0].mxu0 %v711
    %v1045 = vpop.f32.mrb[0].mxu0
    %v1046 = vadd.f32 %v910, %v1045
    %v1047 = vpop.f32.mrb[0].mxu0
    %v1048 = vpop.f32.mrb[0].mxu0
    %v1049 = vpop.f32.mrb[0].mxu0
    %1050 = vdwg.mxu0
    %v1051 = vld [vmem:[%s9] sm:$0x1]
    %v1053 = vlaneseq
    %v1054 = vshrl.u32 %v1053, 7
    %v1055 = vsub.s32 0, %v1054
    %v1056 = vrot.slane %v1051, %v1055
    %v1058 = vadd.f32 %v1046, %v1056
    %vm1059 = vcmask 15360
    %1060 = vst.msk [vmem:[%s10] sm:$0xff] %vm1059, %v1058
    // Predicated region
    $region46: #{critic_forward.1} parent=1 // pred_check
      _
    $region47: #{critic_forward.1} parent=1 // pred_check_branch
      %1062 = sbr.rel (0) target = $region49
    $region48: #{critic_forward.1} parent=1 // pred_region
      _
    $region49: #{critic_forward.1} parent=1 // pred_fallthru
      _
    // Predicated region
    $region50: #{critic_forward.1} parent=1 // pred_check
      _
    $region51: #{critic_forward.1} parent=1 // pred_check_branch
      %1064 = sbr.rel (0) target = $region53
    $region52: #{critic_forward.1} parent=1 // pred_region
      _
    $region53: #{critic_forward.1} parent=1 // pred_fallthru
      _
    %1065 = vsyncpa [#allocation3], 1

</llo_original>
